<compile_context>
chip_gen: v7x
topology: tpu7x:2x2x1
jax: 0.10.0
libtpu: 0.0.40
codegen_flags: <defaults>
</compile_context>

<pallas_src>
import jax
import jax.numpy as jnp
from jax.experimental import pallas as pl
from jax.experimental.pallas import tpu as pltpu


def readout_kernel(counts_ref, h_ref, w_ref, b_ref, out_ref, acc_ref):
    # counts_ref: [B] int32 in SMEM (scalar prefetch)  -- valid nodes per graph
    # h_ref:      [TN, D]   node hidden states for (graph b, node-tile j)
    # w_ref:      [D, R_pad] readout projection weight (lane-padded, resident)
    # b_ref:      [1, R_pad] readout projection bias    (lane-padded, resident)
    # out_ref:    [1, R_pad] graph-level prediction for graph b
    # acc_ref:    [1, D] f32 scratch accumulator (pooled hidden state)
    b = pl.program_id(0)          # graph index          ("parallel")
    j = pl.program_id(1)          # node-tile index      ("arbitrary" reduction)
    n_tiles = pl.num_programs(1)
    tn = h_ref.shape[0]

    @pl.when(j == 0)
    def _init():
        acc_ref[...] = jnp.zeros_like(acc_ref)

    # Build the node-validity mask for this tile from the scalar node count
    # (replaces the dense [B, N, 1] mask input).
    count = counts_ref[b]
    node_ids = jax.lax.broadcasted_iota(jnp.int32, (1, tn), 1) + j * tn
    mask = (node_ids < count).astype(h_ref.dtype)                 # (1, TN)

    # Masked sum-pool over the node axis, routed through the MXU:
    #   (1, TN) @ (TN, D) -> (1, D), accumulated in f32.
    acc_ref[...] += jnp.dot(mask, h_ref[...],
                            preferred_element_type=jnp.float32)

    @pl.when(j == n_tiles - 1)
    def _finalize():
        pooled = acc_ref[...]                                     # (1, D) f32
        out = jnp.dot(pooled, w_ref[...].astype(jnp.float32),
                      preferred_element_type=jnp.float32)         # (1, R_pad)
        out = out + b_ref[...].astype(jnp.float32)
        out_ref[...] = out.astype(out_ref.dtype)


def readout(h, node_counts, w, b, *, tile_n=512):
    """MPNN readout.

    h:            [B, N, D]  node hidden states (f32 or bf16)
    node_counts:  [B]        int32, number of valid (non-padding) nodes per graph
    w:            [D, R]     readout projection weight
    b:            [1, R]     readout projection bias
    returns       [B, R]     float32 graph-level predictions
    """
    B, N, D = h.shape
    R = w.shape[1]

    # Lane-dense projection/output: pad R up to a multiple of 128 lanes.
    R_pad = max(128, ((R + 127) // 128) * 128)
    w_pad = jnp.pad(w, ((0, 0), (0, R_pad - R)))
    b_pad = jnp.pad(b, ((0, 0), (0, R_pad - R)))

    # Node-axis tiling: large tiles amortize per-step overhead; padded node
    # rows are masked out in-kernel by the iota-vs-count compare.
    tn = min(tile_n, N)
    n_pad = ((N + tn - 1) // tn) * tn
    if n_pad != N:
        h = jnp.pad(h, ((0, 0), (0, n_pad - N), (0, 0)))

    node_counts = node_counts.astype(jnp.int32)

    grid_spec = pltpu.PrefetchScalarGridSpec(
        num_scalar_prefetch=1,                     # node_counts -> SMEM
        grid=(B, n_pad // tn),                     # (parallel batch, reduction over nodes)
        in_specs=[
            # Streamed node-hidden tiles (auto double-buffered by Pallas).
            pl.BlockSpec((None, tn, D), lambda bi, j, counts: (bi, j, 0)),
            # Projection weight / bias stay resident in VMEM.
            pl.BlockSpec((D, R_pad), lambda bi, j, counts: (0, 0)),
            pl.BlockSpec((1, R_pad), lambda bi, j, counts: (0, 0)),
        ],
        out_specs=pl.BlockSpec((None, 1, R_pad), lambda bi, j, counts: (bi, 0, 0)),
        scratch_shapes=[pltpu.VMEM((1, D), jnp.float32)],
    )

    out = pl.pallas_call(
        readout_kernel,
        out_shape=jax.ShapeDtypeStruct((B, 1, R_pad), jnp.float32),
        grid_spec=grid_spec,
        compiler_params=pltpu.CompilerParams(
            dimension_semantics=("parallel", "arbitrary"),
            vmem_limit_bytes=32 * 1024 * 1024,
        ),
    )(node_counts, h, w_pad, b_pad)

    return out.reshape(B, R_pad)[:, :R]


if __name__ == "__main__":
    # Config implied by the module:
    #   mode='reg', hidden_dim=32, graph_targets with dims [4, 4] -> readout_dim=8
    B, N, D, R = 2, 8, 32, 8

    key = jax.random.PRNGKey(0)
    k_h, k_w, k_b = jax.random.split(key, 3)

    h = jax.random.normal(k_h, (B, N, D), dtype=jnp.float32)
    # Per-graph valid node counts (first graph 8 real nodes, second 5).
    node_counts = jnp.array([8, 5], dtype=jnp.int32)

    # Deterministic parameter init (synthetic; no checkpoint load).
    w = jax.random.normal(k_w, (D, R), dtype=jnp.float32) * (1.0 / jnp.sqrt(D))
    b = jax.random.normal(k_b, (1, R), dtype=jnp.float32) * 0.01

    out = readout(h, node_counts, w, b)
    out = jax.block_until_ready(out)

    # Reference check in plain JAX.
    mask = (jnp.arange(N)[None, :] < node_counts[:, None]).astype(jnp.float32)
    ref = jnp.sum(h * mask[:, :, None], axis=1) @ w + b
    assert out.shape == (B, R)
    assert jnp.allclose(out, ref, atol=1e-5, rtol=1e-5)

    print("KERNEL_OK")
</pallas_src>

<mosaic_0001>
module attributes {stable_mosaic.version = 11 : i64} {
  func.func @readout_kernel(%arg0: i32, %arg1: i32, %arg2: memref<2xi32, #tpu.memory_space<smem>>, %arg3: memref<1x8x32xf32, #tpu.memory_space<vmem>>, %arg4: memref<32x128xf32, #tpu.memory_space<vmem>>, %arg5: memref<1x128xf32, #tpu.memory_space<vmem>>, %arg6: memref<1x1x128xf32, #tpu.memory_space<vmem>>, %arg7: memref<1x32xf32, #tpu.memory_space<vmem>>) attributes {dimension_semantics = [#tpu.dimension_semantics<parallel>, #tpu.dimension_semantics<arbitrary>], iteration_bounds = array<i64: 2, 1>, scalar_prefetch = 1 : i64, scratch_operands = 1 : i64, tpu.core_type = #tpu.core_type<tc>, window_params = [{transform_indices = @transform_0, window_bounds = array<i64: 1, 8, 32>}, {pipeline_mode = #tpu.pipeline_mode<synchronous>, transform_indices = @transform_1, window_bounds = array<i64: 32, 128>}, {pipeline_mode = #tpu.pipeline_mode<synchronous>, transform_indices = @transform_2, window_bounds = array<i64: 1, 128>}, {transform_indices = @transform_3, window_bounds = array<i64: 1, 1, 128>}]} {
    %c0_i32 = arith.constant 0 : i32
    %0 = arith.cmpi eq, %arg1, %c0_i32 : i32
    %1 = arith.extui %0 : i1 to i32
    %c0_i32_0 = arith.constant 0 : i32
    %2 = arith.cmpi ne, %1, %c0_i32_0 : i32
    scf.if %2 {
      %cst_9 = arith.constant 0.000000e+00 : f32
      %22 = vector.broadcast %cst_9 : f32 to vector<1x32xf32>
      %c0_10 = arith.constant 0 : index
      %c0_11 = arith.constant 0 : index
      %23 = vector.load %arg7[%c0_10, %c0_11] : memref<1x32xf32, #tpu.memory_space<vmem>>, vector<1x32xf32>
      tpu.vector_store %arg7[%c0_10, %c0_11], %22 {strides = array<i32>} : memref<1x32xf32, #tpu.memory_space<vmem>>, vector<1x32xf32>,
    } else {
    }
    %3 = arith.index_cast %arg0 : i32 to index
    %4 = memref.load %arg2[%3] : memref<2xi32, #tpu.memory_space<smem>>
    %5 = tpu.iota {dimensions = array<i32: 1>} : vector<1x8xi32>
    %c8_i32 = arith.constant 8 : i32
    %6 = arith.muli %arg1, %c8_i32 : i32
    %7 = vector.broadcast %6 : i32 to vector<1x8xi32>
    %8 = arith.addi %5, %7 : vector<1x8xi32>
    %9 = vector.broadcast %4 : i32 to vector<1x8xi32>
    %10 = arith.cmpi slt, %8, %9 : vector<1x8xi32>
    %11 = arith.extui %10 : vector<1x8xi1> to vector<1x8xi32>
    %12 = arith.sitofp %11 : vector<1x8xi32> to vector<1x8xf32>
    %c0 = arith.constant 0 : index
    %c0_1 = arith.constant 0 : index
    %13 = vector.load %arg7[%c0, %c0_1] : memref<1x32xf32, #tpu.memory_space<vmem>>, vector<1x32xf32>
    %c0_2 = arith.constant 0 : index
    %c0_3 = arith.constant 0 : index
    %c0_4 = arith.constant 0 : index
    %14 = vector.load %arg3[%c0_2, %c0_3, %c0_4] : memref<1x8x32xf32, #tpu.memory_space<vmem>>, vector<1x8x32xf32>
    %15 = vector.shape_cast %14 : vector<1x8x32xf32> to vector<8x32xf32>
    %cst = arith.constant dense<0.000000e+00> : vector<1x32xf32>
    %16 = tpu.matmul %12, %15, %cst {dimension_numbers = #tpu.dot_dimension_numbers<[1], [0], [0], [1], [0, 0, 1, 1], [], []>} : vector<1x8xf32>, vector<8x32xf32>, vector<1x32xf32> -> vector<1x32xf32>
    %17 = arith.addf %13, %16 : vector<1x32xf32>
    %c0_5 = arith.constant 0 : index
    %c0_6 = arith.constant 0 : index
    %18 = vector.load %arg7[%c0_5, %c0_6] : memref<1x32xf32, #tpu.memory_space<vmem>>, vector<1x32xf32>
    tpu.vector_store %arg7[%c0_5, %c0_6], %17 {strides = array<i32>} : memref<1x32xf32, #tpu.memory_space<vmem>>, vector<1x32xf32>,
    %c0_i32_7 = arith.constant 0 : i32
    %19 = arith.cmpi eq, %arg1, %c0_i32_7 : i32
    %20 = arith.extui %19 : i1 to i32
    %c0_i32_8 = arith.constant 0 : i32
    %21 = arith.cmpi ne, %20, %c0_i32_8 : i32
    scf.if %21 {
      %c0_9 = arith.constant 0 : index
      %c0_10 = arith.constant 0 : index
      %22 = vector.load %arg7[%c0_9, %c0_10] : memref<1x32xf32, #tpu.memory_space<vmem>>, vector<1x32xf32>
      %c0_11 = arith.constant 0 : index
      %c0_12 = arith.constant 0 : index
      %23 = vector.load %arg4[%c0_11, %c0_12] : memref<32x128xf32, #tpu.memory_space<vmem>>, vector<32x128xf32>
      %cst_13 = arith.constant dense<0.000000e+00> : vector<1x128xf32>
      %24 = tpu.matmul %22, %23, %cst_13 {dimension_numbers = #tpu.dot_dimension_numbers<[1], [0], [0], [1], [0, 0, 1, 1], [], []>} : vector<1x32xf32>, vector<32x128xf32>, vector<1x128xf32> -> vector<1x128xf32>
      %c0_14 = arith.constant 0 : index
      %c0_15 = arith.constant 0 : index
      %25 = vector.load %arg5[%c0_14, %c0_15] : memref<1x128xf32, #tpu.memory_space<vmem>>, vector<1x128xf32>
      %26 = arith.addf %24, %25 : vector<1x128xf32>
      %c0_16 = arith.constant 0 : index
      %c0_17 = arith.constant 0 : index
      %c0_18 = arith.constant 0 : index
      %27 = vector.load %arg6[%c0_16, %c0_17, %c0_18] : memref<1x1x128xf32, #tpu.memory_space<vmem>>, vector<1x1x128xf32>
      %28 = vector.shape_cast %27 : vector<1x1x128xf32> to vector<1x128xf32>
      %29 = vector.shape_cast %26 : vector<1x128xf32> to vector<1x1x128xf32>
      tpu.vector_store %arg6[%c0_16, %c0_17, %c0_18], %29 {strides = array<i32>} : memref<1x1x128xf32, #tpu.memory_space<vmem>>, vector<1x1x128xf32>,
    } else {
    }
    return
  }
  func.func @transform_0(%arg0: i32, %arg1: i32, %arg2: memref<2xi32, #tpu.memory_space<smem>>) -> (i32, i32, i32) {
    %c0_i32 = arith.constant 0 : i32
    %c0_i32_0 = arith.constant 0 : i32
    return %arg0, %arg1, %c0_i32 : i32, i32, i32
  }
  func.func @transform_1(%arg0: i32, %arg1: i32, %arg2: memref<2xi32, #tpu.memory_space<smem>>) -> (i32, i32) {
    %c0_i32 = arith.constant 0 : i32
    %c0_i32_0 = arith.constant 0 : i32
    %c0_i32_1 = arith.constant 0 : i32
    return %c0_i32, %c0_i32_0 : i32, i32
  }
  func.func @transform_2(%arg0: i32, %arg1: i32, %arg2: memref<2xi32, #tpu.memory_space<smem>>) -> (i32, i32) {
    %c0_i32 = arith.constant 0 : i32
    %c0_i32_0 = arith.constant 0 : i32
    %c0_i32_1 = arith.constant 0 : i32
    return %c0_i32, %c0_i32_0 : i32, i32
  }
  func.func @transform_3(%arg0: i32, %arg1: i32, %arg2: memref<2xi32, #tpu.memory_space<smem>>) -> (i32, i32, i32) {
    %c0_i32 = arith.constant 0 : i32
    %c0_i32_0 = arith.constant 0 : i32
    %c0_i32_1 = arith.constant 0 : i32
    return %arg0, %c0_i32, %c0_i32_0 : i32, i32, i32
  }
}

</mosaic_0001>

<llo_original>
// kernel: tpu_custom_call.1
$region0: #{tpu_custom_call.1}
  #allocation0 [shape = 'u32[]', space=smem, size = 0x4, offset = 0x4, fixed_abs, tag = 'smem constant byte address 0x4 - core index']
  #allocation1 [shape = 'u32[144,128]{1,0:T(1,128)}', space=vmem, size = 0x12000, scoped, tag = 'internal scratch']
  #allocation2 [shape = 'f32[1,32]{1,0:T(1,128)}', space=vmem, size = 0x200, scoped, tag = 'scratch operand']
  #allocation3 [shape = 's32[1]{0}', space=sflag, size = 0x4, scoped, tag = 'scoped memory for tpu_custom_call.1']
  #allocation4 [shape = 'u8[512]{0}', space=smem, size = 0x200, scoped, tag = 'prefetched SMEM operand 0']
  %s0 = inlined_call_operand.hbm [shape: s32[2], index: 0, kind: input, shape index: {}]
  %s1 = inlined_call_operand.hbm [shape: f32[2,8,32], index: 1, kind: input, shape index: {}]
  %s2 = inlined_call_operand.hbm [shape: f32[32,128], index: 2, kind: input, shape index: {}]
  %s3 = inlined_call_operand.vmem [shape: f32[1,128], index: 3, kind: input, shape index: {}]
  %s4 = inlined_call_operand.hbm [shape: f32[2,1,128], index: 4, kind: output, shape index: {}]
  %s5 = sld [smem:[#allocation0]]
  $region61: #{tpu_custom_call.1} parent=0
    _
  %s7 = ssub.s32 1, %s5
  %s8 = scalar_select 0, %s7, %s5
  %10 = dma.hbm_to_smem %s0, 16, [#allocation4], [#allocation3]
  %11 = dma.done [#allocation3], 16
  %12 = sfence
  $region1: #{tpu_custom_call.1} parent=0
    #allocation5 [shape = 'u8[8192]{0}', space=vmem, size = 0x2000, scoped, tag = 'input window, operand 1']
    #allocation6 [shape = 's32[2]{0}', space=sflag, size = 0x8, scoped, tag = 'scoped memory for tpu_custom_call.1']
    #allocation7 [shape = 's32[2]{0}', space=sflag, size = 0x8, scoped, tag = 'scoped memory for tpu_custom_call.1']
    #allocation8 [shape = 'u8[16384]{0}', space=vmem, size = 0x4000, scoped, tag = 'input window, operand 2, single buffered']
    #allocation9 [shape = 's32[1]{0}', space=sflag, size = 0x4, scoped, tag = 'scoped memory for tpu_custom_call.1']
    #allocation10 [shape = 'u8[1024]{0}', space=vmem, size = 0x400, scoped, tag = 'output window, operand 0']
    %13 = vsyncpa [#allocation6], 0
    %s14 = scalar_lea.sflag [#allocation6], 1
    %15 = vsyncpa %s14, 0
    %16 = vsyncpa [#allocation9], 0
    %17 = vsyncpa [#allocation7], 0
    %s18 = scalar_lea.sflag [#allocation7], 1
    %19 = vsyncpa %s18, 0
    loop: start=0, step=1, limit=4
    $region2: #{tpu_custom_call.1} parent=1 // loop_pre_header
      _
    $region3: #{tpu_custom_call.1} parent=1 // loop_header
      %s21 = sphi 0, %s25
      %p22 = scmp.ge.s32.totalorder %s21, 4
      %s28 = sphi 0, %s40
      %s29 = sphi 0, %s36
      %s30 = sphi 0, %s28
      %s31 = sphi 0, %s29
      %s32 = sphi 0, %s30
      %s33 = sphi 0, %s31
      %s45 = sphi 0, %s47
      %s48 = sphi 0, %s45
      %s49 = sphi 0, %s48
      %s65 = sphi 0, %s49
      %s69 = sphi 0, %s69
      %s71 = sphi 0, %s69
      %s72 = sphi 0, %s71
      %s86 = sphi 0, %s72
      %s90 = sphi 0, %s90
      %s92 = sphi 0, %s90
      %s93 = sphi 0, %s92
      %s107 = sphi 0, %s93
      %s113 = sphi 0, %s115
      %s116 = sphi 0, %s113
      %s117 = sphi 0, %s116
      %s133 = sphi 0, %s117
    $region4: #{tpu_custom_call.1} parent=1 // loop_header_branch
      %24 = sbr.rel (%p22) target = $region8
    $region5: #{tpu_custom_call.1} parent=1 // loop_body
      %s26 = ssub.s32 %s21, 1
      %s27 = ssub.s32 %s21, 2
      %s34 = sadd.s32 1, %s29
      %p35 = scmp.ge.s32.totalorder %s34, 1
      %s36 = scalar_select %p35, 0, %s34
      %s37 = sadd.s32 1, %s28
      %s38 = scalar_select %p35, %s37, %s28
      %p39 = scmp.ge.s32.totalorder %s38, 2
      %s40 = scalar_select %p39, 0, %s38
      %s41 = ssub.s32 %s28, %s40
      %s42 = ssub.s32 %s29, %s36
      %s43 = sor.u32 %s41, %s42
      %p44 = scmp.eq.s32.totalorder %s43, 0
      %s46 = sadd.s32 %s45, 1
      %s47 = scalar_select %p44, %s45, %s46
      %p50 = pneg %p44
      %p51 = scmp.eq.s32.totalorder %s21, 1
      %p52 = por %p50, %p51
      %p53 = scmp.ne.s32.totalorder %s45, %s48
      %p54 = scmp.eq.s32.totalorder %s21, 0
      %p55 = por %p53, %p54
      %p56 = scmp.ne.s32.totalorder %s45, %s48
      %p57 = scmp.eq.s32.totalorder %s26, 1
      %p58 = por %p56, %p57
      %p59 = scmp.ne.s32.totalorder %s48, %s49
      %p60 = scmp.eq.s32.totalorder %s26, 0
      %p61 = por %p59, %p60
      %p62 = scmp.ne.s32.totalorder %s48, %s49
      %p63 = scmp.eq.s32.totalorder %s27, 1
      %p64 = por %p62, %p63
      %p66 = scmp.ne.s32.totalorder %s49, %s65
      %p67 = scmp.eq.s32.totalorder %s27, 0
      %p68 = por %p66, %p67
      %s70 = sadd.s32 %s69, 1
      %p73 = scmp.eq.s32.totalorder %s21, 1
      %p74 = scmp.ne.s32.totalorder %s69, %s71
      %p75 = scmp.eq.s32.totalorder %s21, 0
      %p76 = por %p74, %p75
      %p77 = scmp.ne.s32.totalorder %s69, %s71
      %p78 = scmp.eq.s32.totalorder %s26, 1
      %p79 = por %p77, %p78
      %p80 = scmp.ne.s32.totalorder %s71, %s72
      %p81 = scmp.eq.s32.totalorder %s26, 0
      %p82 = por %p80, %p81
      %p83 = scmp.ne.s32.totalorder %s71, %s72
      %p84 = scmp.eq.s32.totalorder %s27, 1
      %p85 = por %p83, %p84
      %p87 = scmp.ne.s32.totalorder %s72, %s86
      %p88 = scmp.eq.s32.totalorder %s27, 0
      %p89 = por %p87, %p88
      %s91 = sadd.s32 %s90, 1
      %p94 = scmp.eq.s32.totalorder %s21, 1
      %p95 = scmp.ne.s32.totalorder %s90, %s92
      %p96 = scmp.eq.s32.totalorder %s21, 0
      %p97 = por %p95, %p96
      %p98 = scmp.ne.s32.totalorder %s90, %s92
      %p99 = scmp.eq.s32.totalorder %s26, 1
      %p100 = por %p98, %p99
      %p101 = scmp.ne.s32.totalorder %s92, %s93
      %p102 = scmp.eq.s32.totalorder %s26, 0
      %p103 = por %p101, %p102
      %p104 = scmp.ne.s32.totalorder %s92, %s93
      %p105 = scmp.eq.s32.totalorder %s27, 1
      %p106 = por %p104, %p105
      %p108 = scmp.ne.s32.totalorder %s93, %s107
      %p109 = scmp.eq.s32.totalorder %s27, 0
      %p110 = por %p108, %p109
      %s111 = ssub.s32 %s28, %s40
      %p112 = scmp.eq.s32.totalorder %s111, 0
      %s114 = sadd.s32 %s113, 1
      %s115 = scalar_select %p112, %s113, %s114
      %p118 = pneg %p112
      %p119 = scmp.eq.s32.totalorder %s21, 1
      %p120 = por %p118, %p119
      %p121 = scmp.ne.s32.totalorder %s113, %s116
      %p122 = scmp.eq.s32.totalorder %s21, 0
      %p123 = por %p121, %p122
      %p124 = scmp.ne.s32.totalorder %s113, %s116
      %p125 = scmp.eq.s32.totalorder %s26, 1
      %p126 = por %p124, %p125
      %p127 = scmp.ne.s32.totalorder %s116, %s117
      %p128 = scmp.eq.s32.totalorder %s26, 0
      %p129 = por %p127, %p128
      %p130 = scmp.ne.s32.totalorder %s116, %s117
      %p131 = scmp.eq.s32.totalorder %s27, 1
      %p132 = por %p130, %p131
      %p134 = scmp.ne.s32.totalorder %s117, %s133
      %p135 = scmp.eq.s32.totalorder %s27, 0
      %p136 = por %p134, %p135
      %p137 = scmp.le.s32.totalorder 1, %s21
      %p138 = scmp.lt.s32.totalorder %s21, 3
      %p139 = pnand %p137, %p138
      %p140 = pneg %p139
      // Predicated region
      $region9: #{tpu_custom_call.1} parent=5 // pred_check
        _
      $region10: #{tpu_custom_call.1} parent=5 // pred_check_branch
        %142 = sbr.rel (%p139) target = $region12
      $region11: #{tpu_custom_call.1} parent=5 // pred_region
        %s143 = ssub.s32 %s21, 1
        // Predicated region
        $region13: #{tpu_custom_call.1} parent=11 // pred_check
          %p144 = pneg %p82
        $region14: #{tpu_custom_call.1} parent=11 // pred_check_branch
          %146 = sbr.rel (%p144) target = $region16
        $region15: #{tpu_custom_call.1} parent=11 // pred_region
          %s148 = ssub.s32 512, 512
          %149 = vsyncadd [#allocation9], %s148
          %s150 = sshll.u32 [#allocation8], 4
          %s151 = int_to_ptr.vmem [resolvable:$true] %s150
          %156 = dma.hbm_to_vmem [thread:$0]  %s2, 512, %s151, [#allocation9], 128, 128, 8
        $region16: #{tpu_custom_call.1} parent=11 // pred_fallthru
          _
        // Predicated region
        $region17: #{tpu_custom_call.1} parent=11 // pred_check
          %p157 = pneg %p103
        $region18: #{tpu_custom_call.1} parent=11 // pred_check_branch
          %159 = sbr.rel (%p157) target = $region20
        $region19: #{tpu_custom_call.1} parent=11 // pred_region
          _
        $region20: #{tpu_custom_call.1} parent=11 // pred_fallthru
          _
      $region12: #{tpu_custom_call.1} parent=5 // pred_fallthru
        _
      %p160 = scmp.lt.s32.totalorder %s21, 2
      // Predicated region
      $region21: #{tpu_custom_call.1} parent=5 // pred_check
        %p161 = pneg %p160
      $region22: #{tpu_custom_call.1} parent=5 // pred_check_branch
        %163 = sbr.rel (%p161) target = $region24
      $region23: #{tpu_custom_call.1} parent=5 // pred_region
        // Predicated region
        $region25: #{tpu_custom_call.1} parent=23 // pred_check
          %p164 = pneg %p55
        $region26: #{tpu_custom_call.1} parent=23 // pred_check_branch
          %166 = sbr.rel (%p164) target = $region28
        $region27: #{tpu_custom_call.1} parent=23 // pred_region
          %s167 = sand.u32 %s45, 1
          %s168 = scalar_lea.sflag [#allocation6], %s167
          %s169 = sand.u32 %s45, 1
          %s170 = smul.addr %s169, 8
          %s171 = scalar_lea.vmem [#allocation5], %s170
          %s173 = ssub.s32 128, 128
          %174 = vsyncadd %s168, %s173
          %s175 = sadd.s32 %s29, %s28
          %s176 = smul.addr %s175, 128
          %s177 = scalar_lea.hbm %s1, %s176
          %s179 = sshll.u32 %s171, 4
          %s180 = int_to_ptr.vmem [resolvable:$true] %s179
          %182 = dma.hbm_to_vmem [thread:$0]  %s177, 128, %s180, %s168
        $region28: #{tpu_custom_call.1} parent=23 // pred_fallthru
          _
      $region24: #{tpu_custom_call.1} parent=5 // pred_fallthru
        _
      %p183 = scmp.le.s32.totalorder 1, %s21
      %p184 = scmp.lt.s32.totalorder %s21, 3
      %p185 = pnand %p183, %p184
      %p186 = pneg %p185
      // Predicated region
      $region29: #{tpu_custom_call.1} parent=5 // pred_check
        _
      $region30: #{tpu_custom_call.1} parent=5 // pred_check_branch
        %188 = sbr.rel (%p185) target = $region32
      $region31: #{tpu_custom_call.1} parent=5 // pred_region
        %s189 = ssub.s32 %s21, 1
        %s190 = sand.u32 %s48, 1
        %s191 = scalar_lea.sflag [#allocation6], %s190
        %s192 = sand.u32 %s48, 1
        %s193 = smul.addr %s192, 8
        %s194 = scalar_lea.vmem [#allocation5], %s193
        // Predicated region
        $region33: #{tpu_custom_call.1} parent=31 // pred_check
          %p195 = pneg %p61
        $region34: #{tpu_custom_call.1} parent=31 // pred_check_branch
          %197 = sbr.rel (%p195) target = $region36
        $region35: #{tpu_custom_call.1} parent=31 // pred_region
          %198 = dma.done %s191, 128
        $region36: #{tpu_custom_call.1} parent=31 // pred_fallthru
          _
        // Predicated region
        $region37: #{tpu_custom_call.1} parent=31 // pred_check
          %p199 = pneg %p82
        $region38: #{tpu_custom_call.1} parent=31 // pred_check_branch
          %201 = sbr.rel (%p199) target = $region40
        $region39: #{tpu_custom_call.1} parent=31 // pred_region
          %202 = dma.done [#allocation9], 512
        $region40: #{tpu_custom_call.1} parent=31 // pred_fallthru
          _
        %s203 = sand.u32 %s48, 1
        %s204 = scalar_lea.sflag [#allocation6], %s203
        %s205 = sand.u32 %s48, 1
        %s206 = smul.addr %s205, 8
        %s207 = scalar_lea.vmem [#allocation5], %s206
        %p208 = pneg %p61
        %p209 = pneg %p58
        %p210 = pneg %p82
        %p211 = pneg %p79
        %p212 = pneg %p103
        %p213 = pneg %p100
        %p214 = pneg %p129
        %p215 = pneg %p126
        %s216 = sand.u32 %s116, 1
        %s217 = scalar_lea.sflag [#allocation7], %s216
        %s218 = sand.u32 %s116, 1
        %s219 = scalar_lea.vmem [#allocation10], %s218
        %p220 = scmp.eq.s32.totalorder %s31, 0
        // Predicated region
        $region41: #{tpu_custom_call.1} parent=31 // pred_check
          %p221 = pneg %p220
        $region42: #{tpu_custom_call.1} parent=31 // pred_check_branch
          %223 = sbr.rel (%p221) target = $region44
        $region43: #{tpu_custom_call.1} parent=31 // pred_region
          %vm224 = vcmask 253952
          %225 = vst.msk [vmem:[#allocation2] sm:$0x1] %vm224, 0.0
        $region44: #{tpu_custom_call.1} parent=31 // pred_fallthru
          _
        %s226 = sld [smem:[#allocation4 + %s30]]
        %v227 = vlaneseq
        %v228 = vand.u32 %v227, 127
        %s229 = smul.u32 %s31, 8
        %v230 = vstv %s229
        %v231 = vadd.s32 %v228, %v230
        %v232 = vstv %s226
        %vm233 = vcmp.lt.s32.totalorder %v231, %v232
        %v234 = vsel %vm233, 1, 0
        %v235 = vcvt.s32.f32 %v234
        %v236 = vld [vmem:[#allocation2] sm:$0x1]
        %v237 = vld [vmem:[%s194] sm:$0xff]
        %vm238 = vcmask 64512
        %v240 = vsel %vm238, %v235, 0
        %242 = vmatprep.subr.mxu0 0.0
        %243 = vmatpush1.msra.mxu0 %v237
        %244 = vmatprep.subr.mxu0 0.0
        %245 = vmatpush1.msra.mxu0 0.0
        %246 = vmatprep.subr.mxu0 0.0
        %247 = vmatpush1.msra.mxu0 0.0
        %248 = vmatprep.subr.mxu0 0.0
        %249 = vmatpush1.msra.mxu0 0.0
        %250 = vmatprep.subr.mxu0 0.0
        %251 = vmatpush1.msra.mxu0 0.0
        %252 = vmatprep.subr.mxu0 0.0
        %253 = vmatpush1.msra.mxu0 0.0
        %254 = vmatprep.subr.mxu0 0.0
        %255 = vmatpush1.msra.mxu0 0.0
        %256 = vmatprep.subr.mxu0 0.0
        %257 = vmatpush1.msra.mxu0 0.0
        %258 = vmatprep.subr.mxu0 0.0
        %259 = vmatpush1.msra.mxu0 0.0
        %260 = vmatprep.subr.mxu0 0.0
        %261 = vmatpush1.msra.mxu0 0.0
        %262 = vmatprep.subr.mxu0 0.0
        %263 = vmatpush1.msra.mxu0 0.0
        %264 = vmatprep.subr.mxu0 0.0
        %265 = vmatpush1.msra.mxu0 0.0
        %266 = vmatprep.subr.mxu0 0.0
        %267 = vmatpush1.msra.mxu0 0.0
        %268 = vmatprep.subr.mxu0 0.0
        %269 = vmatpush1.msra.mxu0 0.0
        %270 = vmatprep.subr.mxu0 0.0
        %271 = vmatpush1.msra.mxu0 0.0
        %272 = vmatprep.subr.mxu0 0.0
        %273 = vmatpush1.msra.mxu0 0.0
        %274 = vmatprep.subr.mxu0 0.0
        %275 = vmatpush1.msra.mxu0 0.0
        %276 = vmatprep.subr.mxu0 0.0
        %277 = vmatpush1.msra.mxu0 0.0
        %278 = vmatprep.subr.mxu0 0.0
        %279 = vmatpush1.msra.mxu0 0.0
        %280 = vmatprep.subr.mxu0 0.0
        %281 = vmatpush1.msra.mxu0 0.0
        %282 = vmatprep.subr.mxu0 0.0
        %283 = vmatpush1.msra.mxu0 0.0
        %284 = vmatprep.subr.mxu0 0.0
        %285 = vmatpush1.msra.mxu0 0.0
        %286 = vmatprep.subr.mxu0 0.0
        %287 = vmatpush1.msra.mxu0 0.0
        %288 = vmatprep.subr.mxu0 0.0
        %289 = vmatpush1.msra.mxu0 0.0
        %290 = vmatprep.subr.mxu0 0.0
        %291 = vmatpush1.msra.mxu0 0.0
        %292 = vmatprep.subr.mxu0 0.0
        %293 = vmatpush1.msra.mxu0 0.0
        %294 = vmatprep.subr.mxu0 0.0
        %295 = vmatpush1.msra.mxu0 0.0
        %296 = vmatprep.subr.mxu0 0.0
        %297 = vmatpush1.msra.mxu0 0.0
        %298 = vmatprep.subr.mxu0 0.0
        %299 = vmatpush1.msra.mxu0 0.0
        %300 = vmatprep.subr.mxu0 0.0
        %301 = vmatpush1.msra.mxu0 0.0
        %302 = vmatprep.subr.mxu0 0.0
        %303 = vmatpush1.msra.mxu0 0.0
        %304 = vmatprep.subr.mxu0 0.0
        %305 = vmatpush1.msra.mxu0 0.0
        %306 = vmatprep.mubr.f32.mxu0 0.0
        %307 = vmatmul.mubr.f32.gmra.mrb[0].mxu0 %v240
        %v308 = vpop.f32.mrb[0].mxu0
        %v309 = vadd.f32 0.0, %v308
        %v310 = vpop.f32.mrb[0].mxu0
        %311 = vdwg.mxu0
        %v312 = vadd.f32 %v236, %v309
        %vm313 = vcmask 253952
        %314 = vst.msk [vmem:[#allocation2] sm:$0x1] %vm313, %v312
        // Predicated region
        $region45: #{tpu_custom_call.1} parent=31 // pred_check
          %p315 = pneg %p220
        $region46: #{tpu_custom_call.1} parent=31 // pred_check_branch
          %317 = sbr.rel (%p315) target = $region48
        $region47: #{tpu_custom_call.1} parent=31 // pred_region
          %v318 = vld [vmem:[#allocation2] sm:$0x1]
          %v319 = vld [vmem:[#allocation8] sm:$0xff]
          %v320 = vld [vmem:[#allocation8 + $0x8] sm:$0xff]
          %v321 = vld [vmem:[#allocation8 + $0x10] sm:$0xff]
          %v322 = vld [vmem:[#allocation8 + $0x18] sm:$0xff]
          %v323 = vld [vmem:[%s3] sm:$0x1]
          %vm324 = vcmask 261120
          %v326 = vsel %vm324, %v318, 0
          %328 = vmatprep.subr.mxu0 0.0
          %329 = vmatpush1.msra.mxu0 %v319
          %330 = vmatprep.subr.mxu0 0.0
          %331 = vmatpush1.msra.mxu0 %v320
          %332 = vmatprep.subr.mxu0 0.0
          %333 = vmatpush1.msra.mxu0 %v321
          %334 = vmatprep.subr.mxu0 0.0
          %335 = vmatpush1.msra.mxu0 %v322
          %336 = vmatprep.subr.mxu0 0.0
          %337 = vmatpush1.msra.mxu0 0.0
          %338 = vmatprep.subr.mxu0 0.0
          %339 = vmatpush1.msra.mxu0 0.0
          %340 = vmatprep.subr.mxu0 0.0
          %341 = vmatpush1.msra.mxu0 0.0
          %342 = vmatprep.subr.mxu0 0.0
          %343 = vmatpush1.msra.mxu0 0.0
          %344 = vmatprep.subr.mxu0 0.0
          %345 = vmatpush1.msra.mxu0 0.0
          %346 = vmatprep.subr.mxu0 0.0
          %347 = vmatpush1.msra.mxu0 0.0
          %348 = vmatprep.subr.mxu0 0.0
          %349 = vmatpush1.msra.mxu0 0.0
          %350 = vmatprep.subr.mxu0 0.0
          %351 = vmatpush1.msra.mxu0 0.0
          %352 = vmatprep.subr.mxu0 0.0
          %353 = vmatpush1.msra.mxu0 0.0
          %354 = vmatprep.subr.mxu0 0.0
          %355 = vmatpush1.msra.mxu0 0.0
          %356 = vmatprep.subr.mxu0 0.0
          %357 = vmatpush1.msra.mxu0 0.0
          %358 = vmatprep.subr.mxu0 0.0
          %359 = vmatpush1.msra.mxu0 0.0
          %360 = vmatprep.subr.mxu0 0.0
          %361 = vmatpush1.msra.mxu0 0.0
          %362 = vmatprep.subr.mxu0 0.0
          %363 = vmatpush1.msra.mxu0 0.0
          %364 = vmatprep.subr.mxu0 0.0
          %365 = vmatpush1.msra.mxu0 0.0
          %366 = vmatprep.subr.mxu0 0.0
          %367 = vmatpush1.msra.mxu0 0.0
          %368 = vmatprep.subr.mxu0 0.0
          %369 = vmatpush1.msra.mxu0 0.0
          %370 = vmatprep.subr.mxu0 0.0
          %371 = vmatpush1.msra.mxu0 0.0
          %372 = vmatprep.subr.mxu0 0.0
          %373 = vmatpush1.msra.mxu0 0.0
          %374 = vmatprep.subr.mxu0 0.0
          %375 = vmatpush1.msra.mxu0 0.0
          %376 = vmatprep.subr.mxu0 0.0
          %377 = vmatpush1.msra.mxu0 0.0
          %378 = vmatprep.subr.mxu0 0.0
          %379 = vmatpush1.msra.mxu0 0.0
          %380 = vmatprep.subr.mxu0 0.0
          %381 = vmatpush1.msra.mxu0 0.0
          %382 = vmatprep.subr.mxu0 0.0
          %383 = vmatpush1.msra.mxu0 0.0
          %384 = vmatprep.subr.mxu0 0.0
          %385 = vmatpush1.msra.mxu0 0.0
          %386 = vmatprep.subr.mxu0 0.0
          %387 = vmatpush1.msra.mxu0 0.0
          %388 = vmatprep.subr.mxu0 0.0
          %389 = vmatpush1.msra.mxu0 0.0
          %390 = vmatprep.subr.mxu0 0.0
          %391 = vmatpush1.msra.mxu0 0.0
          %392 = vmatprep.mubr.f32.mxu0 0.0
          %393 = vmatmul.mubr.f32.gmra.mrb[0].mxu0 %v326
          %v394 = vpop.f32.mrb[0].mxu0
          %v395 = vadd.f32 %v323, %v394
          %v396 = vpop.f32.mrb[0].mxu0
          %397 = vdwg.mxu0
          %398 = vst [vmem:[%s219] sm:$0x1] %v395
        $region48: #{tpu_custom_call.1} parent=31 // pred_fallthru
          _
        %s399 = sand.u32 %s116, 1
        %s400 = scalar_lea.sflag [#allocation7], %s399
        %s401 = sand.u32 %s116, 1
        %s402 = scalar_lea.vmem [#allocation10], %s401
        // Predicated region
        $region49: #{tpu_custom_call.1} parent=31 // pred_check
          %p403 = pneg %p126
        $region50: #{tpu_custom_call.1} parent=31 // pred_check_branch
          %405 = sbr.rel (%p403) target = $region52
        $region51: #{tpu_custom_call.1} parent=31 // pred_region
          %s407 = ssub.s32 16, 16
          %408 = vsyncadd %s400, %s407
          %s409 = smul.addr %s30, 16
          %s410 = scalar_lea.hbm %s4, %s409
          %s412 = sshll.u32 %s402, 4
          %s413 = int_to_ptr.vmem [resolvable:$true] %s412
          %415 = dma.vmem_to_hbm [thread:$0]  %s413, 16, %s410, %s400
        $region52: #{tpu_custom_call.1} parent=31 // pred_fallthru
          _
      $region32: #{tpu_custom_call.1} parent=5 // pred_fallthru
        _
      %p416 = scmp.le.s32.totalorder 2, %s21
      // Predicated region
      $region53: #{tpu_custom_call.1} parent=5 // pred_check
        %p417 = pneg %p416
      $region54: #{tpu_custom_call.1} parent=5 // pred_check_branch
        %419 = sbr.rel (%p417) target = $region56
      $region55: #{tpu_custom_call.1} parent=5 // pred_region
        %s420 = ssub.s32 %s21, 2
        // Predicated region
        $region57: #{tpu_custom_call.1} parent=55 // pred_check
          %p421 = pneg %p132
        $region58: #{tpu_custom_call.1} parent=55 // pred_check_branch
          %423 = sbr.rel (%p421) target = $region60
        $region59: #{tpu_custom_call.1} parent=55 // pred_region
          %s424 = sand.u32 %s117, 1
          %s425 = scalar_lea.sflag [#allocation7], %s424
          %s426 = sand.u32 %s117, 1
          %s427 = scalar_lea.vmem [#allocation10], %s426
          %428 = dma.done %s425, 16
        $region60: #{tpu_custom_call.1} parent=55 // pred_fallthru
          _
      $region56: #{tpu_custom_call.1} parent=5 // pred_fallthru
        _
    $region6: #{tpu_custom_call.1} parent=1 // loop_footer
      %s25 = sadd.s32 1, %s21
    $region7: #{tpu_custom_call.1} parent=1 // loop_footer_branch
      %20 = sbr.rel target = $region3
    $region8: #{tpu_custom_call.1} parent=1 // loop_exit
      _
    %429 = vsyncpa [#allocation6], 1
    %s430 = scalar_lea.sflag [#allocation6], 1
    %431 = vsyncpa %s430, 1
    %432 = vsyncpa [#allocation9], 1
    %433 = vsyncpa [#allocation7], 1
    %s434 = scalar_lea.sflag [#allocation7], 1
    %435 = vsyncpa %s434, 1

</llo_original>
